<compile_context>
chip_gen: v7x
topology: tpu7x:2x2x1
jax: 0.10.0
libtpu: 0.0.40
codegen_flags: <defaults>
</compile_context>

<pallas_src>
import math

import jax
import jax.numpy as jnp
from jax.experimental import pallas as pl
from jax.experimental.pallas import tpu as pltpu

CARD = 32          # ResNeXt cardinality
EXPANSION = 4      # bottleneck expansion
BN_EPS = 1e-5


def _round_up(x, m):
    return (x + m - 1) // m * m


def _choose_tm(M):
    """Row-tile choice: full (16-aligned) block for small M, large 128-multiples else."""
    if M <= 512:
        tm = _round_up(max(M, 16), 16)     # bf16 packs 2 rows/sublane -> multiples of 16
        return tm, tm
    Mp = _round_up(M, 128)
    for t in (512, 384, 256, 128):
        if Mp % t == 0:
            return t, Mp
    return 128, Mp


# ---------------------------------------------------------------------------
# Pallas kernels
# ---------------------------------------------------------------------------
def _dense_matmul(prep, x2d, residual=None, relu=False, out_dtype=jnp.bfloat16):
    """out = maybe_relu(x @ w + bias [+ residual]).  Single pass over K (tk == Kp).

    prep["w"]: (Kp, Np) bf16, BN scale already folded; prep["b"]: (1, Np) f32.
    MXU accumulates in f32 (preferred_element_type); epilogue in f32.
    """
    wp, bp = prep["w"], prep["b"]
    Kp, Np = wp.shape
    K, N = prep["K"], prep["N"]
    M = x2d.shape[0]
    tm, Mp = _choose_tm(M)
    tn = 256 if Np % 256 == 0 else 128

    xp = jnp.pad(x2d.astype(jnp.bfloat16), ((0, Mp - M), (0, Kp - K)))
    has_res = residual is not None

    in_specs = [
        pl.BlockSpec((tm, Kp), lambda i, j: (i, 0)),
        pl.BlockSpec((Kp, tn), lambda i, j: (0, j)),
        pl.BlockSpec((1, tn), lambda i, j: (0, j)),
    ]
    args = [xp, wp, bp]
    if has_res:
        rp = jnp.pad(residual.astype(jnp.bfloat16), ((0, Mp - M), (0, Np - N)))
        in_specs.append(pl.BlockSpec((tm, tn), lambda i, j: (i, j)))
        args.append(rp)

    def kernel(*refs):
        if has_res:
            x_ref, w_ref, b_ref, r_ref, o_ref = refs
        else:
            x_ref, w_ref, b_ref, o_ref = refs
            r_ref = None
        y = jnp.dot(x_ref[...], w_ref[...],
                    preferred_element_type=jnp.float32) + b_ref[...]
        if r_ref is not None:
            y = y + r_ref[...].astype(jnp.float32)
        if relu:
            y = jnp.maximum(y, 0.0)
        o_ref[...] = y.astype(o_ref.dtype)

    out = pl.pallas_call(
        kernel,
        out_shape=jax.ShapeDtypeStruct((Mp, Np), out_dtype),
        grid_spec=pltpu.PrefetchScalarGridSpec(
            num_scalar_prefetch=0,
            grid=(Mp // tm, Np // tn),
            in_specs=in_specs,
            out_specs=pl.BlockSpec((tm, tn), lambda i, j: (i, j)),
        ),
        compiler_params=pltpu.CompilerParams(
            dimension_semantics=("parallel", "parallel")),
    )(*args)
    return out[:M, :N]


def _grouped_matmul(prep, xcol, relu):
    """Grouped (cardinality=32) 3x3 conv as structured matmuls, no K grid axis.

    xcol: (M, ntile*9*128) channel-tile-major / kpos-minor im2col columns.
    prep["w"]: (ntile*9*128, 128) — ntile stacked (9*128, 128) block-diagonal panels
    (within the 128-channel tile, cin tile == cout tile), BN scale folded in.
    Each grid step (i, j) is one (tm x 1152)·(1152 x 128) MXU matmul.
    """
    M = xcol.shape[0]
    d, ntile = prep["d"], prep["ntile"]
    KP = 9 * 128
    tm, Mp = _choose_tm(M)
    xp = jnp.pad(xcol.astype(jnp.bfloat16), ((0, Mp - M), (0, 0)))

    def kernel(x_ref, w_ref, b_ref, o_ref):
        y = jnp.dot(x_ref[...], w_ref[...],
                    preferred_element_type=jnp.float32) + b_ref[...]
        if relu:
            y = jnp.maximum(y, 0.0)
        o_ref[...] = y.astype(o_ref.dtype)

    out = pl.pallas_call(
        kernel,
        out_shape=jax.ShapeDtypeStruct((Mp, d), jnp.bfloat16),
        grid_spec=pltpu.PrefetchScalarGridSpec(
            num_scalar_prefetch=0,
            grid=(Mp // tm, ntile),
            in_specs=[
                pl.BlockSpec((tm, KP), lambda i, j: (i, j)),
                pl.BlockSpec((KP, 128), lambda i, j: (j, 0)),
                pl.BlockSpec((1, 128), lambda i, j: (0, j)),
            ],
            out_specs=pl.BlockSpec((tm, 128), lambda i, j: (i, j)),
        ),
        compiler_params=pltpu.CompilerParams(
            dimension_semantics=("parallel", "parallel")),
    )(xp, prep["w"], prep["b"])
    return out[:M]


# ---------------------------------------------------------------------------
# Activation glue: im2col, pooling
# ---------------------------------------------------------------------------
def _extract_patches(x, kh, kw, stride, pad):
    # TODO(synk): replace with in-kernel window gathering to avoid HBM patch traffic.
    N, H, W, C = x.shape
    xp = jnp.pad(x, ((0, 0), (pad, pad), (pad, pad), (0, 0)))
    OH = (H + 2 * pad - kh) // stride + 1
    OW = (W + 2 * pad - kw) // stride + 1
    cols = []
    for i in range(kh):
        for j in range(kw):
            cols.append(xp[:, i:i + stride * OH:stride,
                           j:j + stride * OW:stride, :])
    return jnp.stack(cols, axis=3), OH, OW          # (N, OH, OW, kh*kw, C)


def _conv_dense(x, prep, kh, kw, stride, pad, relu, residual=None):
    """Dense (groups=1) conv + folded BN (+ residual) (+ ReLU).  x: NHWC bf16."""
    N, H, W, C = x.shape
    if kh == 1 and kw == 1:
        if stride > 1:
            x = x[:, ::stride, ::stride, :]
        OH, OW = x.shape[1], x.shape[2]
        xcol = x.reshape(N * OH * OW, C)
    else:
        patches, OH, OW = _extract_patches(x, kh, kw, stride, pad)
        xcol = patches.reshape(N * OH * OW, kh * kw * C)
    M = N * OH * OW
    res2d = residual.reshape(M, prep["N"]) if residual is not None else None
    y = _dense_matmul(prep, xcol, residual=res2d, relu=relu)
    return y.reshape(N, OH, OW, prep["N"])


def _conv_grouped3x3(x, prep, stride, relu):
    """Grouped 3x3 conv + folded BN (+ ReLU).  x: NHWC bf16."""
    N, H, W, C = x.shape
    ntile = prep["ntile"]
    patches, OH, OW = _extract_patches(x, 3, 3, stride, 1)   # (N,OH,OW,9,C)
    # channel-tile-major / kpos-minor so each output tile reads one contiguous panel.
    xcol = patches.reshape(N, OH, OW, 9, ntile, 128)
    xcol = jnp.transpose(xcol, (0, 1, 2, 4, 3, 5)).reshape(N * OH * OW, ntile * 9 * 128)
    y = _grouped_matmul(prep, xcol, relu)
    return y.reshape(N, OH, OW, prep["d"])


def _maxpool(x, k, stride, pad):
    # k*k shifted-slice max: trivial VPU work, fused by XLA (no pallas_call needed).
    N, H, W, C = x.shape
    xp = jnp.pad(x, ((0, 0), (pad, pad), (pad, pad), (0, 0)),
                 constant_values=-jnp.inf)
    OH = (H + 2 * pad - k) // stride + 1
    OW = (W + 2 * pad - k) // stride + 1
    out = None
    for i in range(k):
        for j in range(k):
            s = xp[:, i:i + stride * OH:stride, j:j + stride * OW:stride, :]
            out = s if out is None else jnp.maximum(out, s)
    return out


def _avgpool(x, k):
    # AvgPool2d(k, stride=1), no padding; mean over k*k window in f32.
    N, H, W, C = x.shape
    OH, OW = H - k + 1, W - k + 1
    acc = jnp.zeros((N, OH, OW, C), jnp.float32)
    for i in range(k):
        for j in range(k):
            acc = acc + x[:, i:i + OH, j:j + OW, :].astype(jnp.float32)
    return acc * (1.0 / (k * k))


# ---------------------------------------------------------------------------
# One-time parameter preprocessing (hoisted out of the forward pass)
# ---------------------------------------------------------------------------
def _bn_fold(c):
    # BatchNorm2d inference; init matches the PyTorch module: gamma=1, beta=0,
    # running_mean=0, running_var=1.
    gamma = jnp.ones((c,), jnp.float32)
    beta = jnp.zeros((c,), jnp.float32)
    mean = jnp.zeros((c,), jnp.float32)
    var = jnp.ones((c,), jnp.float32)
    scale = gamma / jnp.sqrt(var + BN_EPS)
    return scale, beta - mean * scale


def _prep_dense(w, scale, bias):
    """PyTorch (cout,cin,kh,kw) -> padded bf16 (Kp,Np) weight with BN scale folded."""
    cout, cin, kh, kw = w.shape
    K, N = kh * kw * cin, cout
    Kp, Np = _round_up(K, 128), _round_up(N, 128)
    wmat = jnp.transpose(w, (2, 3, 1, 0)).reshape(K, N) * scale.reshape(1, N)
    wmat = jnp.pad(wmat, ((0, Kp - K), (0, Np - N))).astype(jnp.bfloat16)
    b = jnp.pad(bias.astype(jnp.float32), (0, Np - N)).reshape(1, Np)
    return {"w": wmat, "b": b, "K": K, "N": N}


def _prep_grouped(w, scale, bias):
    """PyTorch grouped (d, d/CARD, 3, 3) -> compact (ntile*9*128, 128) bf16 weight.

    Panel j (rows j*9*128 .. ) maps input-channel tile j (kpos-major, channel-minor)
    to output-channel tile j; each (128,128) sub-block is block-diagonal with
    128/cg groups of cg x cg.  BN scale folded into output columns.
    """
    d, cg, kh, kw = w.shape
    assert d % 128 == 0 and 128 % cg == 0
    ntile, gpt = d // 128, 128 // cg
    # (kpos, out_tile, out_group, out_local, in_local)
    wr = jnp.transpose(w, (2, 3, 0, 1)).reshape(kh * kw, ntile, gpt, cg, cg)
    eye = jnp.eye(gpt, dtype=w.dtype)
    # blk[p,t, row=h*cg+in_local, col=g*cg+out_local] = wr[p,t,g,out,in] * (h==g)
    blk = jnp.einsum('ptgoc,gh->pthcgo', wr, eye).reshape(kh * kw, ntile, 128, 128)
    blk = jnp.transpose(blk, (1, 0, 2, 3)) * scale.reshape(ntile, 1, 1, 128)
    wc = blk.reshape(ntile * kh * kw * 128, 128).astype(jnp.bfloat16)
    b = bias.astype(jnp.float32).reshape(1, d)
    return {"w": wc, "b": b, "d": d, "ntile": ntile}


def prepare_params(params):
    s, b = _bn_fold(64)
    prep = {"stem": _prep_dense(params["conv1"], s, b), "layers": []}
    for blocks in params["layers"]:
        pblocks = []
        for blk in blocks:
            d = blk["conv1"].shape[0]
            cout = blk["conv3"].shape[0]
            s1, b1 = _bn_fold(d)
            s2, b2 = _bn_fold(d)
            s3, b3 = _bn_fold(cout)
            p = {"conv1": _prep_dense(blk["conv1"], s1, b1),
                 "conv2": _prep_grouped(blk["conv2"], s2, b2),
                 "conv3": _prep_dense(blk["conv3"], s3, b3),
                 "stride": blk["stride"]}
            if "down" in blk:
                sd, bd = _bn_fold(cout)
                p["down"] = _prep_dense(blk["down"], sd, bd)
            pblocks.append(p)
        prep["layers"].append(pblocks)
    feat, ncls = params["fc_w"].shape[1], params["fc_w"].shape[0]
    Np = _round_up(ncls, 128)
    fcw = jnp.pad(params["fc_w"].T, ((0, 0), (0, Np - ncls))).astype(jnp.bfloat16)
    fcb = jnp.pad(params["fc_b"].astype(jnp.float32), (0, Np - ncls)).reshape(1, Np)
    prep["fc"] = {"w": fcw, "b": fcb, "K": feat, "N": ncls}
    return prep


# ---------------------------------------------------------------------------
# Parameter init (deterministic, matching the PyTorch module's __init__)
# ---------------------------------------------------------------------------
def _conv_init(key, cout, cin, kh, kw):
    n = kh * kw * cout
    return jax.random.normal(key, (cout, cin, kh, kw), jnp.float32) * math.sqrt(2.0 / n)


def init_params(key, layers, num_classes=10):
    params = {}
    key, k = jax.random.split(key)
    params["conv1"] = _conv_init(k, 64, 3, 7, 7)
    inplanes = 64
    all_layers = []
    for planes, nblocks, stride in zip((64, 128, 256, 512), layers, (1, 2, 2, 2)):
        blocks = []
        for bidx in range(nblocks):
            s = stride if bidx == 0 else 1
            d = planes * 2  # ResNeXt bottleneck width
            key, k1, k2, k3, k4 = jax.random.split(key, 5)
            blk = {
                "conv1": _conv_init(k1, d, inplanes, 1, 1),
                "conv2": _conv_init(k2, d, d // CARD, 3, 3),      # grouped 3x3
                "conv3": _conv_init(k3, planes * EXPANSION, d, 1, 1),
                "stride": s,
            }
            if s != 1 or inplanes != planes * EXPANSION:
                blk["down"] = _conv_init(k4, planes * EXPANSION, inplanes, 1, 1)
            inplanes = planes * EXPANSION
            blocks.append(blk)
        all_layers.append(blocks)
    params["layers"] = all_layers
    key, kw_, kb = jax.random.split(key, 3)
    feat = 512 * EXPANSION
    bound = 1.0 / math.sqrt(feat)
    params["fc_w"] = jax.random.uniform(kw_, (num_classes, feat), jnp.float32, -bound, bound)
    params["fc_b"] = jax.random.uniform(kb, (num_classes,), jnp.float32, -bound, bound)
    return params


# ---------------------------------------------------------------------------
# Forward
# ---------------------------------------------------------------------------
def _bottleneck(x, blk):
    out = _conv_dense(x, blk["conv1"], 1, 1, 1, 0, relu=True)
    out = _conv_grouped3x3(out, blk["conv2"], stride=blk["stride"], relu=True)
    if "down" in blk:
        identity = _conv_dense(x, blk["down"], 1, 1, blk["stride"], 0, relu=False)
    else:
        identity = x
    out = _conv_dense(out, blk["conv3"], 1, 1, 1, 0, relu=True, residual=identity)
    return out


def resnext_forward(prep, x_nchw):
    x = jnp.transpose(x_nchw, (0, 2, 3, 1)).astype(jnp.bfloat16)   # NCHW -> NHWC bf16
    x = _conv_dense(x, prep["stem"], 7, 7, 2, 3, relu=True)
    x = _maxpool(x, 3, 2, 1)
    for blocks in prep["layers"]:
        for blk in blocks:
            x = _bottleneck(x, blk)
    x = _avgpool(x, 3)                                   # (N,1,1,512*expansion) f32
    feats = x.reshape(x.shape[0], -1)
    return _dense_matmul(prep["fc"], feats, relu=False, out_dtype=jnp.float32)


if __name__ == "__main__":
    key = jax.random.PRNGKey(0)
    pkey, xkey = jax.random.split(key)
    # Small ResNeXt: layers=[1,1,1,1].  Input 3x96x96 so that layer4 output is 3x3 and
    # AvgPool2d(3, stride=1) yields 1x1 (matching the fc(512*expansion) contract).
    params = init_params(pkey, layers=(1, 1, 1, 1), num_classes=10)
    prep = prepare_params(params)          # one-time weight preprocessing (hoisted)
    jax.block_until_ready(prep)
    x = jax.random.normal(xkey, (2, 3, 96, 96), jnp.float32)       # NCHW like PyTorch
    logits = jax.block_until_ready(resnext_forward(prep, x))
    assert logits.shape == (2, 10)
    assert bool(jnp.all(jnp.isfinite(logits)))
    print("KERNEL_OK")
</pallas_src>

<mosaic_0001>
module attributes {stable_mosaic.version = 11 : i64} {
  func.func @kernel(%arg0: i32, %arg1: i32, %arg2: memref<512x256xbf16, #tpu.memory_space<vmem>>, %arg3: memref<256x128xbf16, #tpu.memory_space<vmem>>, %arg4: memref<1x128xf32, #tpu.memory_space<vmem>>, %arg5: memref<512x128xbf16, #tpu.memory_space<vmem>>) attributes {dimension_semantics = [#tpu.dimension_semantics<parallel>, #tpu.dimension_semantics<parallel>], iteration_bounds = array<i64: 9, 1>, scalar_prefetch = 0 : i64, scratch_operands = 0 : i64, tpu.core_type = #tpu.core_type<tc>, window_params = [{transform_indices = @transform_0, window_bounds = array<i64: 512, 256>}, {transform_indices = @transform_1, window_bounds = array<i64: 256, 128>}, {transform_indices = @transform_2, window_bounds = array<i64: 1, 128>}, {transform_indices = @transform_3, window_bounds = array<i64: 512, 128>}]} {
    %c0 = arith.constant 0 : index
    %c0_0 = arith.constant 0 : index
    %0 = vector.load %arg2[%c0, %c0_0] : memref<512x256xbf16, #tpu.memory_space<vmem>>, vector<512x256xbf16>
    %c0_1 = arith.constant 0 : index
    %c0_2 = arith.constant 0 : index
    %1 = vector.load %arg3[%c0_1, %c0_2] : memref<256x128xbf16, #tpu.memory_space<vmem>>, vector<256x128xbf16>
    %cst = arith.constant dense<0.000000e+00> : vector<512x128xf32>
    %2 = tpu.matmul %0, %1, %cst {dimension_numbers = #tpu.dot_dimension_numbers<[1], [0], [0], [1], [0, 0, 1, 1], [], []>} : vector<512x256xbf16>, vector<256x128xbf16>, vector<512x128xf32> -> vector<512x128xf32>
    %c0_3 = arith.constant 0 : index
    %c0_4 = arith.constant 0 : index
    %3 = vector.load %arg4[%c0_3, %c0_4] : memref<1x128xf32, #tpu.memory_space<vmem>>, vector<1x128xf32>
    %4 = vector.broadcast %3 : vector<1x128xf32> to vector<512x128xf32>
    %5 = arith.addf %2, %4 : vector<512x128xf32>
    %cst_5 = arith.constant 0.000000e+00 : f32
    %6 = vector.broadcast %cst_5 : f32 to vector<512x128xf32>
    %7 = arith.maximumf %5, %6 : vector<512x128xf32>
    %8 = arith.truncf %7 : vector<512x128xf32> to vector<512x128xbf16>
    %c0_6 = arith.constant 0 : index
    %c0_7 = arith.constant 0 : index
    %9 = vector.load %arg5[%c0_6, %c0_7] : memref<512x128xbf16, #tpu.memory_space<vmem>>, vector<512x128xbf16>
    tpu.vector_store %arg5[%c0_6, %c0_7], %8 {strides = array<i32>} : memref<512x128xbf16, #tpu.memory_space<vmem>>, vector<512x128xbf16>,
    return
  }
  func.func @transform_0(%arg0: i32, %arg1: i32) -> (i32, i32) {
    %c0_i32 = arith.constant 0 : i32
    %c0_i32_0 = arith.constant 0 : i32
    return %arg0, %c0_i32 : i32, i32
  }
  func.func @transform_1(%arg0: i32, %arg1: i32) -> (i32, i32) {
    %c0_i32 = arith.constant 0 : i32
    %c0_i32_0 = arith.constant 0 : i32
    return %c0_i32, %arg1 : i32, i32
  }
  func.func @transform_2(%arg0: i32, %arg1: i32) -> (i32, i32) {
    %c0_i32 = arith.constant 0 : i32
    %c0_i32_0 = arith.constant 0 : i32
    return %c0_i32, %arg1 : i32, i32
  }
  func.func @transform_3(%arg0: i32, %arg1: i32) -> (i32, i32) {
    %c0_i32 = arith.constant 0 : i32
    return %arg0, %arg1 : i32, i32
  }
}

</mosaic_0001>

<llo_original>
// kernel: tpu_custom_call.1
$region0: #{tpu_custom_call.1}
  #allocation0 [shape = 'u32[]', space=smem, size = 0x4, offset = 0x4, fixed_abs, tag = 'smem constant byte address 0x4 - core index']
  #allocation1 [shape = 'u32[144,128]{1,0:T(1,128)}', space=vmem, size = 0x12000, scoped, tag = 'internal scratch']
  %s0 = inlined_call_operand.hbm [shape: bf16[4608,256], index: 0, kind: input, shape index: {}]
  %s1 = inlined_call_operand.hbm [shape: bf16[256,128], index: 1, kind: input, shape index: {}]
  %s2 = inlined_call_operand.hbm [shape: f32[1,128], index: 2, kind: input, shape index: {}]
  %s3 = inlined_call_operand.hbm [shape: bf16[4608,128], index: 3, kind: output, shape index: {}]
  %s4 = sld [smem:[#allocation0]]
  $region57: #{tpu_custom_call.1} parent=0
    _
  %s6 = ssub.s32 1, %s4
  %s7 = scalar_select 0, %s6, %s4
  $region1: #{tpu_custom_call.1} parent=0
    #allocation2 [shape = 'u8[524288]{0}', space=vmem, size = 0x80000, scoped, tag = 'input window, operand 0']
    #allocation3 [shape = 's32[2]{0}', space=sflag, size = 0x8, scoped, tag = 'scoped memory for tpu_custom_call.1']
    #allocation4 [shape = 's32[2]{0}', space=sflag, size = 0x8, scoped, tag = 'scoped memory for tpu_custom_call.1']
    #allocation5 [shape = 'u8[65536]{0}', space=vmem, size = 0x10000, scoped, tag = 'input window, operand 1, single buffered']
    #allocation6 [shape = 's32[1]{0}', space=sflag, size = 0x4, scoped, tag = 'scoped memory for tpu_custom_call.1']
    #allocation7 [shape = 'u8[512]{0}', space=vmem, size = 0x400, scoped, tag = 'input window, operand 2, single buffered']
    #allocation8 [shape = 'u8[262144]{0}', space=vmem, size = 0x40000, scoped, tag = 'output window, operand 0']
    %8 = vsyncpa [#allocation3], 0
    %s9 = scalar_lea.sflag [#allocation3], 1
    %10 = vsyncpa %s9, 0
    %11 = vsyncpa [#allocation6], 0
    %12 = vsyncpa [#allocation4], 0
    %s13 = scalar_lea.sflag [#allocation4], 1
    %14 = vsyncpa %s13, 0
    loop: start=0, step=1, limit=11
    $region2: #{tpu_custom_call.1} parent=1 // loop_pre_header
      _
    $region3: #{tpu_custom_call.1} parent=1 // loop_header
      %s16 = sphi 0, %s20
      %p17 = scmp.ge.s32.totalorder %s16, 11
      %s23 = sphi 0, %s35
      %s24 = sphi 0, %s31
      %s25 = sphi 0, %s23
      %s26 = sphi 0, %s24
      %s27 = sphi 0, %s25
      %s28 = sphi 0, %s26
      %s38 = sphi 0, %s40
      %s41 = sphi 0, %s38
      %s42 = sphi 0, %s41
      %s58 = sphi 0, %s42
      %s64 = sphi 0, %s66
      %s67 = sphi 0, %s64
      %s68 = sphi 0, %s67
      %s84 = sphi 0, %s68
      %s90 = sphi 0, %s92
      %s93 = sphi 0, %s90
      %s94 = sphi 0, %s93
      %s110 = sphi 0, %s94
      %s118 = sphi 0, %s120
      %s121 = sphi 0, %s118
      %s122 = sphi 0, %s121
      %s138 = sphi 0, %s122
    $region4: #{tpu_custom_call.1} parent=1 // loop_header_branch
      %19 = sbr.rel (%p17) target = $region8
    $region5: #{tpu_custom_call.1} parent=1 // loop_body
      %s21 = ssub.s32 %s16, 1
      %s22 = ssub.s32 %s16, 2
      %s29 = sadd.s32 1, %s24
      %p30 = scmp.ge.s32.totalorder %s29, 1
      %s31 = scalar_select %p30, 0, %s29
      %s32 = sadd.s32 1, %s23
      %s33 = scalar_select %p30, %s32, %s23
      %p34 = scmp.ge.s32.totalorder %s33, 9
      %s35 = scalar_select %p34, 0, %s33
      %s36 = ssub.s32 %s23, %s35
      %p37 = scmp.eq.s32.totalorder %s36, 0
      %s39 = sadd.s32 %s38, 1
      %s40 = scalar_select %p37, %s38, %s39
      %p43 = pneg %p37
      %p44 = scmp.eq.s32.totalorder %s16, 8
      %p45 = por %p43, %p44
      %p46 = scmp.ne.s32.totalorder %s38, %s41
      %p47 = scmp.eq.s32.totalorder %s16, 0
      %p48 = por %p46, %p47
      %p49 = scmp.ne.s32.totalorder %s38, %s41
      %p50 = scmp.eq.s32.totalorder %s21, 8
      %p51 = por %p49, %p50
      %p52 = scmp.ne.s32.totalorder %s41, %s42
      %p53 = scmp.eq.s32.totalorder %s21, 0
      %p54 = por %p52, %p53
      %p55 = scmp.ne.s32.totalorder %s41, %s42
      %p56 = scmp.eq.s32.totalorder %s22, 8
      %p57 = por %p55, %p56
      %p59 = scmp.ne.s32.totalorder %s42, %s58
      %p60 = scmp.eq.s32.totalorder %s22, 0
      %p61 = por %p59, %p60
      %s62 = ssub.s32 %s24, %s31
      %p63 = scmp.eq.s32.totalorder %s62, 0
      %s65 = sadd.s32 %s64, 1
      %s66 = scalar_select %p63, %s64, %s65
      %p69 = pneg %p63
      %p70 = scmp.eq.s32.totalorder %s16, 8
      %p71 = por %p69, %p70
      %p72 = scmp.ne.s32.totalorder %s64, %s67
      %p73 = scmp.eq.s32.totalorder %s16, 0
      %p74 = por %p72, %p73
      %p75 = scmp.ne.s32.totalorder %s64, %s67
      %p76 = scmp.eq.s32.totalorder %s21, 8
      %p77 = por %p75, %p76
      %p78 = scmp.ne.s32.totalorder %s67, %s68
      %p79 = scmp.eq.s32.totalorder %s21, 0
      %p80 = por %p78, %p79
      %p81 = scmp.ne.s32.totalorder %s67, %s68
      %p82 = scmp.eq.s32.totalorder %s22, 8
      %p83 = por %p81, %p82
      %p85 = scmp.ne.s32.totalorder %s68, %s84
      %p86 = scmp.eq.s32.totalorder %s22, 0
      %p87 = por %p85, %p86
      %s88 = ssub.s32 %s24, %s31
      %p89 = scmp.eq.s32.totalorder %s88, 0
      %s91 = sadd.s32 %s90, 1
      %s92 = scalar_select %p89, %s90, %s91
      %p95 = pneg %p89
      %p96 = scmp.eq.s32.totalorder %s16, 8
      %p97 = por %p95, %p96
      %p98 = scmp.ne.s32.totalorder %s90, %s93
      %p99 = scmp.eq.s32.totalorder %s16, 0
      %p100 = por %p98, %p99
      %p101 = scmp.ne.s32.totalorder %s90, %s93
      %p102 = scmp.eq.s32.totalorder %s21, 8
      %p103 = por %p101, %p102
      %p104 = scmp.ne.s32.totalorder %s93, %s94
      %p105 = scmp.eq.s32.totalorder %s21, 0
      %p106 = por %p104, %p105
      %p107 = scmp.ne.s32.totalorder %s93, %s94
      %p108 = scmp.eq.s32.totalorder %s22, 8
      %p109 = por %p107, %p108
      %p111 = scmp.ne.s32.totalorder %s94, %s110
      %p112 = scmp.eq.s32.totalorder %s22, 0
      %p113 = por %p111, %p112
      %s114 = ssub.s32 %s23, %s35
      %s115 = ssub.s32 %s24, %s31
      %s116 = sor.u32 %s114, %s115
      %p117 = scmp.eq.s32.totalorder %s116, 0
      %s119 = sadd.s32 %s118, 1
      %s120 = scalar_select %p117, %s118, %s119
      %p123 = pneg %p117
      %p124 = scmp.eq.s32.totalorder %s16, 8
      %p125 = por %p123, %p124
      %p126 = scmp.ne.s32.totalorder %s118, %s121
      %p127 = scmp.eq.s32.totalorder %s16, 0
      %p128 = por %p126, %p127
      %p129 = scmp.ne.s32.totalorder %s118, %s121
      %p130 = scmp.eq.s32.totalorder %s21, 8
      %p131 = por %p129, %p130
      %p132 = scmp.ne.s32.totalorder %s121, %s122
      %p133 = scmp.eq.s32.totalorder %s21, 0
      %p134 = por %p132, %p133
      %p135 = scmp.ne.s32.totalorder %s121, %s122
      %p136 = scmp.eq.s32.totalorder %s22, 8
      %p137 = por %p135, %p136
      %p139 = scmp.ne.s32.totalorder %s122, %s138
      %p140 = scmp.eq.s32.totalorder %s22, 0
      %p141 = por %p139, %p140
      %p142 = scmp.le.s32.totalorder 1, %s16
      %p143 = scmp.lt.s32.totalorder %s16, 10
      %p144 = pnand %p142, %p143
      %p145 = pneg %p144
      // Predicated region
      $region9: #{tpu_custom_call.1} parent=5 // pred_check
        _
      $region10: #{tpu_custom_call.1} parent=5 // pred_check_branch
        %147 = sbr.rel (%p144) target = $region12
      $region11: #{tpu_custom_call.1} parent=5 // pred_region
        %s148 = ssub.s32 %s16, 1
        // Predicated region
        $region13: #{tpu_custom_call.1} parent=11 // pred_check
          %p149 = pneg %p80
        $region14: #{tpu_custom_call.1} parent=11 // pred_check_branch
          %151 = sbr.rel (%p149) target = $region16
        $region15: #{tpu_custom_call.1} parent=11 // pred_region
          %s153 = ssub.s32 2048, 2048
          %154 = vsyncadd [#allocation6], %s153
          %s155 = smul.addr %s26, 64
          %s156 = scalar_lea.hbm %s1, %s155
          %s157 = sshll.u32 [#allocation5], 4
          %s158 = int_to_ptr.vmem [resolvable:$true] %s157
          %163 = dma.hbm_to_vmem [thread:$0]  %s156, 2048, %s158, [#allocation6], 64, 64, 4
        $region16: #{tpu_custom_call.1} parent=11 // pred_fallthru
          _
        // Predicated region
        $region17: #{tpu_custom_call.1} parent=11 // pred_check
          %p164 = pneg %p106
        $region18: #{tpu_custom_call.1} parent=11 // pred_check_branch
          %166 = sbr.rel (%p164) target = $region20
        $region19: #{tpu_custom_call.1} parent=11 // pred_region
          %s168 = ssub.s32 16, 16
          %169 = vsyncadd [#allocation6], %s168
          %s170 = smul.addr %s26, 16
          %s171 = scalar_lea.hbm %s2, %s170
          %s173 = sshll.u32 [#allocation7], 4
          %s174 = int_to_ptr.vmem [resolvable:$true] %s173
          %176 = dma.hbm_to_vmem [thread:$0]  %s171, 16, %s174, [#allocation6]
        $region20: #{tpu_custom_call.1} parent=11 // pred_fallthru
          _
      $region12: #{tpu_custom_call.1} parent=5 // pred_fallthru
        _
      %p177 = scmp.lt.s32.totalorder %s16, 9
      // Predicated region
      $region21: #{tpu_custom_call.1} parent=5 // pred_check
        %p178 = pneg %p177
      $region22: #{tpu_custom_call.1} parent=5 // pred_check_branch
        %180 = sbr.rel (%p178) target = $region24
      $region23: #{tpu_custom_call.1} parent=5 // pred_region
        // Predicated region
        $region25: #{tpu_custom_call.1} parent=23 // pred_check
          %p181 = pneg %p48
        $region26: #{tpu_custom_call.1} parent=23 // pred_check_branch
          %183 = sbr.rel (%p181) target = $region28
        $region27: #{tpu_custom_call.1} parent=23 // pred_region
          %s184 = sand.u32 %s38, 1
          %s185 = scalar_lea.sflag [#allocation3], %s184
          %s186 = sand.u32 %s38, 1
          %s187 = smul.addr %s186, 512
          %s188 = scalar_lea.vmem [#allocation2], %s187
          %s189 = smul.u32 64, %s23
          %s191 = ssub.s32 8192, 8192
          %192 = vsyncadd %s185, %s191
          %s193 = smul.addr %s189, 2
          %s194 = smul.addr %s193, 64
          %s195 = scalar_lea.hbm %s0, %s194
          %s196 = sshll.u32 %s188, 4
          %s197 = int_to_ptr.vmem [resolvable:$true] %s196
          %202 = dma.hbm_to_vmem [thread:$0]  %s195, 8192, %s197, %s185, 128, 128, 8
        $region28: #{tpu_custom_call.1} parent=23 // pred_fallthru
          _
      $region24: #{tpu_custom_call.1} parent=5 // pred_fallthru
        _
      %p203 = scmp.le.s32.totalorder 1, %s16
      %p204 = scmp.lt.s32.totalorder %s16, 10
      %p205 = pnand %p203, %p204
      %p206 = pneg %p205
      // Predicated region
      $region29: #{tpu_custom_call.1} parent=5 // pred_check
        _
      $region30: #{tpu_custom_call.1} parent=5 // pred_check_branch
        %208 = sbr.rel (%p205) target = $region32
      $region31: #{tpu_custom_call.1} parent=5 // pred_region
        %s209 = ssub.s32 %s16, 1
        %s210 = sand.u32 %s41, 1
        %s211 = scalar_lea.sflag [#allocation3], %s210
        %s212 = sand.u32 %s41, 1
        %s213 = smul.addr %s212, 512
        %s214 = scalar_lea.vmem [#allocation2], %s213
        // Predicated region
        $region33: #{tpu_custom_call.1} parent=31 // pred_check
          %p215 = pneg %p54
        $region34: #{tpu_custom_call.1} parent=31 // pred_check_branch
          %217 = sbr.rel (%p215) target = $region36
        $region35: #{tpu_custom_call.1} parent=31 // pred_region
          %218 = dma.done %s211, 8192
        $region36: #{tpu_custom_call.1} parent=31 // pred_fallthru
          _
        // Predicated region
        $region37: #{tpu_custom_call.1} parent=31 // pred_check
          %p219 = pneg %p80
        $region38: #{tpu_custom_call.1} parent=31 // pred_check_branch
          %221 = sbr.rel (%p219) target = $region40
        $region39: #{tpu_custom_call.1} parent=31 // pred_region
          %222 = dma.done [#allocation6], 2048
        $region40: #{tpu_custom_call.1} parent=31 // pred_fallthru
          _
        // Predicated region
        $region41: #{tpu_custom_call.1} parent=31 // pred_check
          %p223 = pneg %p106
        $region42: #{tpu_custom_call.1} parent=31 // pred_check_branch
          %225 = sbr.rel (%p223) target = $region44
        $region43: #{tpu_custom_call.1} parent=31 // pred_region
          %226 = dma.done [#allocation6], 16
        $region44: #{tpu_custom_call.1} parent=31 // pred_fallthru
          _
        %s227 = sand.u32 %s41, 1
        %s228 = scalar_lea.sflag [#allocation3], %s227
        %s229 = sand.u32 %s41, 1
        %s230 = smul.addr %s229, 512
        %s231 = scalar_lea.vmem [#allocation2], %s230
        %p232 = pneg %p54
        %p233 = pneg %p51
        %p234 = pneg %p80
        %p235 = pneg %p77
        %p236 = pneg %p106
        %p237 = pneg %p103
        %p238 = pneg %p134
        %p239 = pneg %p131
        %s240 = sand.u32 %s121, 1
        %s241 = scalar_lea.sflag [#allocation4], %s240
        %s242 = sand.u32 %s121, 1
        %s243 = smul.addr %s242, 256
        %s244 = scalar_lea.vmem [#allocation8], %s243
        %s245 = smul.u32 64, %s25
        %s246 = smul.u32 64, %s25
        %v248 = vld [vmem:[%s214] sm:$0xff]
        %v249 = vld [vmem:[%s214 + $0x8] sm:$0xff]
        %v250 = vld [vmem:[%s214 + $0x10] sm:$0xff]
        %v251 = vld [vmem:[%s214 + $0x18] sm:$0xff]
        %v252 = vld [vmem:[%s214 + $0x20] sm:$0xff]
        %v253 = vld [vmem:[%s214 + $0x28] sm:$0xff]
        %v254 = vld [vmem:[%s214 + $0x30] sm:$0xff]
        %v255 = vld [vmem:[%s214 + $0x38] sm:$0xff]
        %v256 = vld [vmem:[%s214 + $0x40] sm:$0xff]
        %v257 = vld [vmem:[%s214 + $0x48] sm:$0xff]
        %v258 = vld [vmem:[%s214 + $0x50] sm:$0xff]
        %v259 = vld [vmem:[%s214 + $0x58] sm:$0xff]
        %v260 = vld [vmem:[%s214 + $0x60] sm:$0xff]
        %v261 = vld [vmem:[%s214 + $0x68] sm:$0xff]
        %v262 = vld [vmem:[%s214 + $0x70] sm:$0xff]
        %v263 = vld [vmem:[%s214 + $0x78] sm:$0xff]
        %v264 = vld [vmem:[%s214 + $0x80] sm:$0xff]
        %v265 = vld [vmem:[%s214 + $0x88] sm:$0xff]
        %v266 = vld [vmem:[%s214 + $0x90] sm:$0xff]
        %v267 = vld [vmem:[%s214 + $0x98] sm:$0xff]
        %v268 = vld [vmem:[%s214 + $0xa0] sm:$0xff]
        %v269 = vld [vmem:[%s214 + $0xa8] sm:$0xff]
        %v270 = vld [vmem:[%s214 + $0xb0] sm:$0xff]
        %v271 = vld [vmem:[%s214 + $0xb8] sm:$0xff]
        %v272 = vld [vmem:[%s214 + $0xc0] sm:$0xff]
        %v273 = vld [vmem:[%s214 + $0xc8] sm:$0xff]
        %v274 = vld [vmem:[%s214 + $0xd0] sm:$0xff]
        %v275 = vld [vmem:[%s214 + $0xd8] sm:$0xff]
        %v276 = vld [vmem:[%s214 + $0xe0] sm:$0xff]
        %v277 = vld [vmem:[%s214 + $0xe8] sm:$0xff]
        %v278 = vld [vmem:[%s214 + $0xf0] sm:$0xff]
        %v279 = vld [vmem:[%s214 + $0xf8] sm:$0xff]
        %v280 = vld [vmem:[%s214 + $0x100] sm:$0xff]
        %v281 = vld [vmem:[%s214 + $0x108] sm:$0xff]
        %v282 = vld [vmem:[%s214 + $0x110] sm:$0xff]
        %v283 = vld [vmem:[%s214 + $0x118] sm:$0xff]
        %v284 = vld [vmem:[%s214 + $0x120] sm:$0xff]
        %v285 = vld [vmem:[%s214 + $0x128] sm:$0xff]
        %v286 = vld [vmem:[%s214 + $0x130] sm:$0xff]
        %v287 = vld [vmem:[%s214 + $0x138] sm:$0xff]
        %v288 = vld [vmem:[%s214 + $0x140] sm:$0xff]
        %v289 = vld [vmem:[%s214 + $0x148] sm:$0xff]
        %v290 = vld [vmem:[%s214 + $0x150] sm:$0xff]
        %v291 = vld [vmem:[%s214 + $0x158] sm:$0xff]
        %v292 = vld [vmem:[%s214 + $0x160] sm:$0xff]
        %v293 = vld [vmem:[%s214 + $0x168] sm:$0xff]
        %v294 = vld [vmem:[%s214 + $0x170] sm:$0xff]
        %v295 = vld [vmem:[%s214 + $0x178] sm:$0xff]
        %v296 = vld [vmem:[%s214 + $0x180] sm:$0xff]
        %v297 = vld [vmem:[%s214 + $0x188] sm:$0xff]
        %v298 = vld [vmem:[%s214 + $0x190] sm:$0xff]
        %v299 = vld [vmem:[%s214 + $0x198] sm:$0xff]
        %v300 = vld [vmem:[%s214 + $0x1a0] sm:$0xff]
        %v301 = vld [vmem:[%s214 + $0x1a8] sm:$0xff]
        %v302 = vld [vmem:[%s214 + $0x1b0] sm:$0xff]
        %v303 = vld [vmem:[%s214 + $0x1b8] sm:$0xff]
        %v304 = vld [vmem:[%s214 + $0x1c0] sm:$0xff]
        %v305 = vld [vmem:[%s214 + $0x1c8] sm:$0xff]
        %v306 = vld [vmem:[%s214 + $0x1d0] sm:$0xff]
        %v307 = vld [vmem:[%s214 + $0x1d8] sm:$0xff]
        %v308 = vld [vmem:[%s214 + $0x1e0] sm:$0xff]
        %v309 = vld [vmem:[%s214 + $0x1e8] sm:$0xff]
        %v310 = vld [vmem:[%s214 + $0x1f0] sm:$0xff]
        %v311 = vld [vmem:[%s214 + $0x1f8] sm:$0xff]
        %v312 = vld [vmem:[#allocation5] sm:$0xf]
        %v313 = vld [vmem:[#allocation5 + $0x4] sm:$0xf]
        %v314 = vld [vmem:[#allocation5 + $0x8] sm:$0xf]
        %v315 = vld [vmem:[#allocation5 + $0xc] sm:$0xf]
        %v316 = vld [vmem:[#allocation5 + $0x10] sm:$0xf]
        %v317 = vld [vmem:[#allocation5 + $0x14] sm:$0xf]
        %v318 = vld [vmem:[#allocation5 + $0x18] sm:$0xf]
        %v319 = vld [vmem:[#allocation5 + $0x1c] sm:$0xf]
        %v320 = vld [vmem:[#allocation5 + $0x20] sm:$0xf]
        %v321 = vld [vmem:[#allocation5 + $0x24] sm:$0xf]
        %v322 = vld [vmem:[#allocation5 + $0x28] sm:$0xf]
        %v323 = vld [vmem:[#allocation5 + $0x2c] sm:$0xf]
        %v324 = vld [vmem:[#allocation5 + $0x30] sm:$0xf]
        %v325 = vld [vmem:[#allocation5 + $0x34] sm:$0xf]
        %v326 = vld [vmem:[#allocation5 + $0x38] sm:$0xf]
        %v327 = vld [vmem:[#allocation5 + $0x3c] sm:$0xf]
        %v328 = vld [vmem:[#allocation5 + $0x40] sm:$0xf]
        %v329 = vld [vmem:[#allocation5 + $0x44] sm:$0xf]
        %v330 = vld [vmem:[#allocation5 + $0x48] sm:$0xf]
        %v331 = vld [vmem:[#allocation5 + $0x4c] sm:$0xf]
        %v332 = vld [vmem:[#allocation5 + $0x50] sm:$0xf]
        %v333 = vld [vmem:[#allocation5 + $0x54] sm:$0xf]
        %v334 = vld [vmem:[#allocation5 + $0x58] sm:$0xf]
        %v335 = vld [vmem:[#allocation5 + $0x5c] sm:$0xf]
        %v336 = vld [vmem:[#allocation5 + $0x60] sm:$0xf]
        %v337 = vld [vmem:[#allocation5 + $0x64] sm:$0xf]
        %v338 = vld [vmem:[#allocation5 + $0x68] sm:$0xf]
        %v339 = vld [vmem:[#allocation5 + $0x6c] sm:$0xf]
        %v340 = vld [vmem:[#allocation5 + $0x70] sm:$0xf]
        %v341 = vld [vmem:[#allocation5 + $0x74] sm:$0xf]
        %v342 = vld [vmem:[#allocation5 + $0x78] sm:$0xf]
        %v343 = vld [vmem:[#allocation5 + $0x7c] sm:$0xf]
        %v344 = vld [vmem:[#allocation7] sm:$0x1]
        %v346 = vlaneseq
        %v347 = vshrl.u32 %v346, 7
        %v348 = vsub.s32 0, %v347
        %v349 = vrot.slane %v344, %v348
        %v415 = vunpack.c.l.b16 %v248
        %v416 = vunpack.c.h.b16 %v248
        %v417 = vunpack.c.l.b16 %v249
        %v418 = vunpack.c.h.b16 %v249
        %v419 = vunpack.c.l.b16 %v250
        %v420 = vunpack.c.h.b16 %v250
        %v421 = vunpack.c.l.b16 %v251
        %v422 = vunpack.c.h.b16 %v251
        %v423 = vunpack.c.l.b16 %v252
        %v424 = vunpack.c.h.b16 %v252
        %v425 = vunpack.c.l.b16 %v253
        %v426 = vunpack.c.h.b16 %v253
        %v427 = vunpack.c.l.b16 %v254
        %v428 = vunpack.c.h.b16 %v254
        %v429 = vunpack.c.l.b16 %v255
        %v430 = vunpack.c.h.b16 %v255
        %v431 = vunpack.c.l.b16 %v256
        %v432 = vunpack.c.h.b16 %v256
        %v433 = vunpack.c.l.b16 %v257
        %v434 = vunpack.c.h.b16 %v257
        %v435 = vunpack.c.l.b16 %v258
        %v436 = vunpack.c.h.b16 %v258
        %v437 = vunpack.c.l.b16 %v259
        %v438 = vunpack.c.h.b16 %v259
        %v439 = vunpack.c.l.b16 %v260
        %v440 = vunpack.c.h.b16 %v260
        %v441 = vunpack.c.l.b16 %v261
        %v442 = vunpack.c.h.b16 %v261
        %v443 = vunpack.c.l.b16 %v262
        %v444 = vunpack.c.h.b16 %v262
        %v445 = vunpack.c.l.b16 %v263
        %v446 = vunpack.c.h.b16 %v263
        %v447 = vunpack.c.l.b16 %v264
        %v448 = vunpack.c.h.b16 %v264
        %v449 = vunpack.c.l.b16 %v265
        %v450 = vunpack.c.h.b16 %v265
        %v451 = vunpack.c.l.b16 %v266
        %v452 = vunpack.c.h.b16 %v266
        %v453 = vunpack.c.l.b16 %v267
        %v454 = vunpack.c.h.b16 %v267
        %v455 = vunpack.c.l.b16 %v268
        %v456 = vunpack.c.h.b16 %v268
        %v457 = vunpack.c.l.b16 %v269
        %v458 = vunpack.c.h.b16 %v269
        %v459 = vunpack.c.l.b16 %v270
        %v460 = vunpack.c.h.b16 %v270
        %v461 = vunpack.c.l.b16 %v271
        %v462 = vunpack.c.h.b16 %v271
        %v463 = vunpack.c.l.b16 %v272
        %v464 = vunpack.c.h.b16 %v272
        %v465 = vunpack.c.l.b16 %v273
        %v466 = vunpack.c.h.b16 %v273
        %v467 = vunpack.c.l.b16 %v274
        %v468 = vunpack.c.h.b16 %v274
        %v469 = vunpack.c.l.b16 %v275
        %v470 = vunpack.c.h.b16 %v275
        %v471 = vunpack.c.l.b16 %v276
        %v472 = vunpack.c.h.b16 %v276
        %v473 = vunpack.c.l.b16 %v277
        %v474 = vunpack.c.h.b16 %v277
        %v475 = vunpack.c.l.b16 %v278
        %v476 = vunpack.c.h.b16 %v278
        %v477 = vunpack.c.l.b16 %v279
        %v478 = vunpack.c.h.b16 %v279
        %v479 = vunpack.c.l.b16 %v280
        %v480 = vunpack.c.h.b16 %v280
        %v481 = vunpack.c.l.b16 %v281
        %v482 = vunpack.c.h.b16 %v281
        %v483 = vunpack.c.l.b16 %v282
        %v484 = vunpack.c.h.b16 %v282
        %v485 = vunpack.c.l.b16 %v283
        %v486 = vunpack.c.h.b16 %v283
        %v487 = vunpack.c.l.b16 %v284
        %v488 = vunpack.c.h.b16 %v284
        %v489 = vunpack.c.l.b16 %v285
        %v490 = vunpack.c.h.b16 %v285
        %v491 = vunpack.c.l.b16 %v286
        %v492 = vunpack.c.h.b16 %v286
        %v493 = vunpack.c.l.b16 %v287
        %v494 = vunpack.c.h.b16 %v287
        %v495 = vunpack.c.l.b16 %v288
        %v496 = vunpack.c.h.b16 %v288
        %v497 = vunpack.c.l.b16 %v289
        %v498 = vunpack.c.h.b16 %v289
        %v499 = vunpack.c.l.b16 %v290
        %v500 = vunpack.c.h.b16 %v290
        %v501 = vunpack.c.l.b16 %v291
        %v502 = vunpack.c.h.b16 %v291
        %v503 = vunpack.c.l.b16 %v292
        %v504 = vunpack.c.h.b16 %v292
        %v505 = vunpack.c.l.b16 %v293
        %v506 = vunpack.c.h.b16 %v293
        %v507 = vunpack.c.l.b16 %v294
        %v508 = vunpack.c.h.b16 %v294
        %v509 = vunpack.c.l.b16 %v295
        %v510 = vunpack.c.h.b16 %v295
        %v511 = vunpack.c.l.b16 %v296
        %v512 = vunpack.c.h.b16 %v296
        %v513 = vunpack.c.l.b16 %v297
        %v514 = vunpack.c.h.b16 %v297
        %v515 = vunpack.c.l.b16 %v298
        %v516 = vunpack.c.h.b16 %v298
        %v517 = vunpack.c.l.b16 %v299
        %v518 = vunpack.c.h.b16 %v299
        %v519 = vunpack.c.l.b16 %v300
        %v520 = vunpack.c.h.b16 %v300
        %v521 = vunpack.c.l.b16 %v301
        %v522 = vunpack.c.h.b16 %v301
        %v523 = vunpack.c.l.b16 %v302
        %v524 = vunpack.c.h.b16 %v302
        %v525 = vunpack.c.l.b16 %v303
        %v526 = vunpack.c.h.b16 %v303
        %v527 = vunpack.c.l.b16 %v304
        %v528 = vunpack.c.h.b16 %v304
        %v529 = vunpack.c.l.b16 %v305
        %v530 = vunpack.c.h.b16 %v305
        %v531 = vunpack.c.l.b16 %v306
        %v532 = vunpack.c.h.b16 %v306
        %v533 = vunpack.c.l.b16 %v307
        %v534 = vunpack.c.h.b16 %v307
        %v535 = vunpack.c.l.b16 %v308
        %v536 = vunpack.c.h.b16 %v308
        %v537 = vunpack.c.l.b16 %v309
        %v538 = vunpack.c.h.b16 %v309
        %v539 = vunpack.c.l.b16 %v310
        %v540 = vunpack.c.h.b16 %v310
        %v541 = vunpack.c.l.b16 %v311
        %v542 = vunpack.c.h.b16 %v311
        %v543 = vpack.c.b16 %v417, %v415
        %v544 = vpack.c.b16 %v418, %v416
        %v545 = vpack.c.b16 %v421, %v419
        %v546 = vpack.c.b16 %v422, %v420
        %v547 = vpack.c.b16 %v425, %v423
        %v548 = vpack.c.b16 %v426, %v424
        %v549 = vpack.c.b16 %v429, %v427
        %v550 = vpack.c.b16 %v430, %v428
        %v551 = vpack.c.b16 %v433, %v431
        %v552 = vpack.c.b16 %v434, %v432
        %v553 = vpack.c.b16 %v437, %v435
        %v554 = vpack.c.b16 %v438, %v436
        %v555 = vpack.c.b16 %v441, %v439
        %v556 = vpack.c.b16 %v442, %v440
        %v557 = vpack.c.b16 %v445, %v443
        %v558 = vpack.c.b16 %v446, %v444
        %v559 = vpack.c.b16 %v449, %v447
        %v560 = vpack.c.b16 %v450, %v448
        %v561 = vpack.c.b16 %v453, %v451
        %v562 = vpack.c.b16 %v454, %v452
        %v563 = vpack.c.b16 %v457, %v455
        %v564 = vpack.c.b16 %v458, %v456
        %v565 = vpack.c.b16 %v461, %v459
        %v566 = vpack.c.b16 %v462, %v460
        %v567 = vpack.c.b16 %v465, %v463
        %v568 = vpack.c.b16 %v466, %v464
        %v569 = vpack.c.b16 %v469, %v467
        %v570 = vpack.c.b16 %v470, %v468
        %v571 = vpack.c.b16 %v473, %v471
        %v572 = vpack.c.b16 %v474, %v472
        %v573 = vpack.c.b16 %v477, %v475
        %v574 = vpack.c.b16 %v478, %v476
        %v575 = vpack.c.b16 %v481, %v479
        %v576 = vpack.c.b16 %v482, %v480
        %v577 = vpack.c.b16 %v485, %v483
        %v578 = vpack.c.b16 %v486, %v484
        %v579 = vpack.c.b16 %v489, %v487
        %v580 = vpack.c.b16 %v490, %v488
        %v581 = vpack.c.b16 %v493, %v491
        %v582 = vpack.c.b16 %v494, %v492
        %v583 = vpack.c.b16 %v497, %v495
        %v584 = vpack.c.b16 %v498, %v496
        %v585 = vpack.c.b16 %v501, %v499
        %v586 = vpack.c.b16 %v502, %v500
        %v587 = vpack.c.b16 %v505, %v503
        %v588 = vpack.c.b16 %v506, %v504
        %v589 = vpack.c.b16 %v509, %v507
        %v590 = vpack.c.b16 %v510, %v508
        %v591 = vpack.c.b16 %v513, %v511
        %v592 = vpack.c.b16 %v514, %v512
        %v593 = vpack.c.b16 %v517, %v515
        %v594 = vpack.c.b16 %v518, %v516
        %v595 = vpack.c.b16 %v521, %v519
        %v596 = vpack.c.b16 %v522, %v520
        %v597 = vpack.c.b16 %v525, %v523
        %v598 = vpack.c.b16 %v526, %v524
        %v599 = vpack.c.b16 %v529, %v527
        %v600 = vpack.c.b16 %v530, %v528
        %v601 = vpack.c.b16 %v533, %v531
        %v602 = vpack.c.b16 %v534, %v532
        %v603 = vpack.c.b16 %v537, %v535
        %v604 = vpack.c.b16 %v538, %v536
        %v605 = vpack.c.b16 %v541, %v539
        %v606 = vpack.c.b16 %v542, %v540
        %v703 = vunpack.c.l.b16 %v312
        %v704 = vunpack.c.l.b16 %v313
        %v705 = vunpack.c.l.b16 %v314
        %v706 = vunpack.c.l.b16 %v315
        %v707 = vunpack.c.l.b16 %v316
        %v708 = vunpack.c.l.b16 %v317
        %v709 = vunpack.c.l.b16 %v318
        %v710 = vunpack.c.l.b16 %v319
        %v711 = vunpack.c.l.b16 %v320
        %v712 = vunpack.c.l.b16 %v321
        %v713 = vunpack.c.l.b16 %v322
        %v714 = vunpack.c.l.b16 %v323
        %v715 = vunpack.c.l.b16 %v324
        %v716 = vunpack.c.l.b16 %v325
        %v717 = vunpack.c.l.b16 %v326
        %v718 = vunpack.c.l.b16 %v327
        %v719 = vunpack.c.l.b16 %v328
        %v720 = vunpack.c.l.b16 %v329
        %v721 = vunpack.c.l.b16 %v330
        %v722 = vunpack.c.l.b16 %v331
        %v723 = vunpack.c.l.b16 %v332
        %v724 = vunpack.c.l.b16 %v333
        %v725 = vunpack.c.l.b16 %v334
        %v726 = vunpack.c.l.b16 %v335
        %v727 = vunpack.c.l.b16 %v336
        %v728 = vunpack.c.l.b16 %v337
        %v729 = vunpack.c.l.b16 %v338
        %v730 = vunpack.c.l.b16 %v339
        %v731 = vunpack.c.l.b16 %v340
        %v732 = vunpack.c.l.b16 %v341
        %v733 = vunpack.c.l.b16 %v342
        %v734 = vunpack.c.l.b16 %v343
        %v735 = vpack.c.b16 %v704, %v703
        %v736 = vpack.c.b16 %v706, %v705
        %v737 = vpack.c.b16 %v708, %v707
        %v738 = vpack.c.b16 %v710, %v709
        %v739 = vpack.c.b16 %v712, %v711
        %v740 = vpack.c.b16 %v714, %v713
        %v741 = vpack.c.b16 %v716, %v715
        %v742 = vpack.c.b16 %v718, %v717
        %v743 = vpack.c.b16 %v720, %v719
        %v744 = vpack.c.b16 %v722, %v721
        %v745 = vpack.c.b16 %v724, %v723
        %v746 = vpack.c.b16 %v726, %v725
        %v747 = vpack.c.b16 %v728, %v727
        %v748 = vpack.c.b16 %v730, %v729
        %v749 = vpack.c.b16 %v732, %v731
        %v750 = vpack.c.b16 %v734, %v733
        %767 = vmatprep.subr.bf16.mxu0 0
        %768 = vmatpush1.bf16.msra.mxu0 %v735
        %769 = vmatprep.subr.bf16.mxu0 0
        %770 = vmatpush1.bf16.msra.mxu0 %v736
        %771 = vmatprep.subr.bf16.mxu0 0
        %772 = vmatpush1.bf16.msra.mxu0 %v737
        %773 = vmatprep.subr.bf16.mxu0 0
        %774 = vmatpush1.bf16.msra.mxu0 %v738
        %775 = vmatprep.subr.bf16.mxu0 0
        %776 = vmatpush1.bf16.msra.mxu0 %v739
        %777 = vmatprep.subr.bf16.mxu0 0
        %778 = vmatpush1.bf16.msra.mxu0 %v740
        %779 = vmatprep.subr.bf16.mxu0 0
        %780 = vmatpush1.bf16.msra.mxu0 %v741
        %781 = vmatprep.subr.bf16.mxu0 0
        %782 = vmatpush1.bf16.msra.mxu0 %v742
        %783 = vmatprep.subr.bf16.mxu0 0
        %784 = vmatpush1.bf16.msra.mxu0 %v743
        %785 = vmatprep.subr.bf16.mxu0 0
        %786 = vmatpush1.bf16.msra.mxu0 %v744
        %787 = vmatprep.subr.bf16.mxu0 0
        %788 = vmatpush1.bf16.msra.mxu0 %v745
        %789 = vmatprep.subr.bf16.mxu0 0
        %790 = vmatpush1.bf16.msra.mxu0 %v746
        %791 = vmatprep.subr.bf16.mxu0 0
        %792 = vmatpush1.bf16.msra.mxu0 %v747
        %793 = vmatprep.subr.bf16.mxu0 0
        %794 = vmatpush1.bf16.msra.mxu0 %v748
        %795 = vmatprep.subr.bf16.mxu0 0
        %796 = vmatpush1.bf16.msra.mxu0 %v749
        %797 = vmatprep.subr.bf16.mxu0 0
        %798 = vmatpush1.bf16.msra.mxu0 %v750
        %799 = vmatprep.mubr.bf16.mxu0 %v544
        %800 = vmatmul.mubr.bf16.gmra.mrb[0].mxu0 %v543
        %v801 = vpop.f32.mrb[0].mxu0
        %v802 = vadd.f32 %v349, %v801
        %v803 = vpop.f32.mrb[0].mxu0
        %v804 = vpop.f32.mrb[0].mxu0
        %v805 = vadd.f32 %v349, %v804
        %v806 = vpop.f32.mrb[0].mxu0
        %807 = vmatprep.mubr.bf16.mxu0 %v546
        %808 = vmatmul.mubr.bf16.gmra.mrb[0].mxu0 %v545
        %v809 = vpop.f32.mrb[0].mxu0
        %v810 = vadd.f32 %v349, %v809
        %v811 = vpop.f32.mrb[0].mxu0
        %v812 = vpop.f32.mrb[0].mxu0
        %v813 = vadd.f32 %v349, %v812
        %v814 = vpop.f32.mrb[0].mxu0
        %815 = vmatprep.mubr.bf16.mxu0 %v548
        %816 = vmatmul.mubr.bf16.gmra.mrb[0].mxu0 %v547
        %v817 = vpop.f32.mrb[0].mxu0
        %v818 = vadd.f32 %v349, %v817
        %v819 = vpop.f32.mrb[0].mxu0
        %v820 = vpop.f32.mrb[0].mxu0
        %v821 = vadd.f32 %v349, %v820
        %v822 = vpop.f32.mrb[0].mxu0
        %823 = vmatprep.mubr.bf16.mxu0 %v550
        %824 = vmatmul.mubr.bf16.gmra.mrb[0].mxu0 %v549
        %v825 = vpop.f32.mrb[0].mxu0
        %v826 = vadd.f32 %v349, %v825
        %v827 = vpop.f32.mrb[0].mxu0
        %v828 = vpop.f32.mrb[0].mxu0
        %v829 = vadd.f32 %v349, %v828
        %v830 = vpop.f32.mrb[0].mxu0
        %831 = vmatprep.mubr.bf16.mxu0 %v552
        %832 = vmatmul.mubr.bf16.gmra.mrb[0].mxu0 %v551
        %v833 = vpop.f32.mrb[0].mxu0
        %v834 = vadd.f32 %v349, %v833
        %v835 = vpop.f32.mrb[0].mxu0
        %v836 = vpop.f32.mrb[0].mxu0
        %v837 = vadd.f32 %v349, %v836
        %v838 = vpop.f32.mrb[0].mxu0
        %839 = vmatprep.mubr.bf16.mxu0 %v554
        %840 = vmatmul.mubr.bf16.gmra.mrb[0].mxu0 %v553
        %v841 = vpop.f32.mrb[0].mxu0
        %v842 = vadd.f32 %v349, %v841
        %v843 = vpop.f32.mrb[0].mxu0
        %v844 = vpop.f32.mrb[0].mxu0
        %v845 = vadd.f32 %v349, %v844
        %v846 = vpop.f32.mrb[0].mxu0
        %847 = vmatprep.mubr.bf16.mxu0 %v556
        %848 = vmatmul.mubr.bf16.gmra.mrb[0].mxu0 %v555
        %v849 = vpop.f32.mrb[0].mxu0
        %v850 = vadd.f32 %v349, %v849
        %v851 = vpop.f32.mrb[0].mxu0
        %v852 = vpop.f32.mrb[0].mxu0
        %v853 = vadd.f32 %v349, %v852
        %v854 = vpop.f32.mrb[0].mxu0
        %855 = vmatprep.mubr.bf16.mxu0 %v558
        %856 = vmatmul.mubr.bf16.gmra.mrb[0].mxu0 %v557
        %v857 = vpop.f32.mrb[0].mxu0
        %v858 = vadd.f32 %v349, %v857
        %v859 = vpop.f32.mrb[0].mxu0
        %v860 = vpop.f32.mrb[0].mxu0
        %v861 = vadd.f32 %v349, %v860
        %v862 = vpop.f32.mrb[0].mxu0
        %863 = vmatprep.mubr.bf16.mxu0 %v560
        %864 = vmatmul.mubr.bf16.gmra.mrb[0].mxu0 %v559
        %v865 = vpop.f32.mrb[0].mxu0
        %v866 = vadd.f32 %v349, %v865
        %v867 = vpop.f32.mrb[0].mxu0
        %v868 = vpop.f32.mrb[0].mxu0
        %v869 = vadd.f32 %v349, %v868
        %v870 = vpop.f32.mrb[0].mxu0
        %871 = vmatprep.mubr.bf16.mxu0 %v562
        %872 = vmatmul.mubr.bf16.gmra.mrb[0].mxu0 %v561
        %v873 = vpop.f32.mrb[0].mxu0
        %v874 = vadd.f32 %v349, %v873
        %v875 = vpop.f32.mrb[0].mxu0
        %v876 = vpop.f32.mrb[0].mxu0
        %v877 = vadd.f32 %v349, %v876
        %v878 = vpop.f32.mrb[0].mxu0
        %879 = vmatprep.mubr.bf16.mxu0 %v564
        %880 = vmatmul.mubr.bf16.gmra.mrb[0].mxu0 %v563
        %v881 = vpop.f32.mrb[0].mxu0
        %v882 = vadd.f32 %v349, %v881
        %v883 = vpop.f32.mrb[0].mxu0
        %v884 = vpop.f32.mrb[0].mxu0
        %v885 = vadd.f32 %v349, %v884
        %v886 = vpop.f32.mrb[0].mxu0
        %887 = vmatprep.mubr.bf16.mxu0 %v566
        %888 = vmatmul.mubr.bf16.gmra.mrb[0].mxu0 %v565
        %v889 = vpop.f32.mrb[0].mxu0
        %v890 = vadd.f32 %v349, %v889
        %v891 = vpop.f32.mrb[0].mxu0
        %v892 = vpop.f32.mrb[0].mxu0
        %v893 = vadd.f32 %v349, %v892
        %v894 = vpop.f32.mrb[0].mxu0
        %895 = vmatprep.mubr.bf16.mxu0 %v568
        %896 = vmatmul.mubr.bf16.gmra.mrb[0].mxu0 %v567
        %v897 = vpop.f32.mrb[0].mxu0
        %v898 = vadd.f32 %v349, %v897
        %v899 = vpop.f32.mrb[0].mxu0
        %v900 = vpop.f32.mrb[0].mxu0
        %v901 = vadd.f32 %v349, %v900
        %v902 = vpop.f32.mrb[0].mxu0
        %903 = vmatprep.mubr.bf16.mxu0 %v570
        %904 = vmatmul.mubr.bf16.gmra.mrb[0].mxu0 %v569
        %v905 = vpop.f32.mrb[0].mxu0
        %v906 = vadd.f32 %v349, %v905
        %v907 = vpop.f32.mrb[0].mxu0
        %v908 = vpop.f32.mrb[0].mxu0
        %v909 = vadd.f32 %v349, %v908
        %v910 = vpop.f32.mrb[0].mxu0
        %911 = vmatprep.mubr.bf16.mxu0 %v572
        %912 = vmatmul.mubr.bf16.gmra.mrb[0].mxu0 %v571
        %v913 = vpop.f32.mrb[0].mxu0
        %v914 = vadd.f32 %v349, %v913
        %v915 = vpop.f32.mrb[0].mxu0
        %v916 = vpop.f32.mrb[0].mxu0
        %v917 = vadd.f32 %v349, %v916
        %v918 = vpop.f32.mrb[0].mxu0
        %919 = vmatprep.mubr.bf16.mxu0 %v574
        %920 = vmatmul.mubr.bf16.gmra.mrb[0].mxu0 %v573
        %v921 = vpop.f32.mrb[0].mxu0
        %v922 = vadd.f32 %v349, %v921
        %v923 = vpop.f32.mrb[0].mxu0
        %v924 = vpop.f32.mrb[0].mxu0
        %v925 = vadd.f32 %v349, %v924
        %v926 = vpop.f32.mrb[0].mxu0
        %927 = vmatprep.mubr.bf16.mxu0 %v576
        %928 = vmatmul.mubr.bf16.gmra.mrb[0].mxu0 %v575
        %v929 = vpop.f32.mrb[0].mxu0
        %v930 = vadd.f32 %v349, %v929
        %v931 = vpop.f32.mrb[0].mxu0
        %v932 = vpop.f32.mrb[0].mxu0
        %v933 = vadd.f32 %v349, %v932
        %v934 = vpop.f32.mrb[0].mxu0
        %935 = vmatprep.mubr.bf16.mxu0 %v578
        %936 = vmatmul.mubr.bf16.gmra.mrb[0].mxu0 %v577
        %v937 = vpop.f32.mrb[0].mxu0
        %v938 = vadd.f32 %v349, %v937
        %v939 = vpop.f32.mrb[0].mxu0
        %v940 = vpop.f32.mrb[0].mxu0
        %v941 = vadd.f32 %v349, %v940
        %v942 = vpop.f32.mrb[0].mxu0
        %943 = vmatprep.mubr.bf16.mxu0 %v580
        %944 = vmatmul.mubr.bf16.gmra.mrb[0].mxu0 %v579
        %v945 = vpop.f32.mrb[0].mxu0
        %v946 = vadd.f32 %v349, %v945
        %v947 = vpop.f32.mrb[0].mxu0
        %v948 = vpop.f32.mrb[0].mxu0
        %v949 = vadd.f32 %v349, %v948
        %v950 = vpop.f32.mrb[0].mxu0
        %951 = vmatprep.mubr.bf16.mxu0 %v582
        %952 = vmatmul.mubr.bf16.gmra.mrb[0].mxu0 %v581
        %v953 = vpop.f32.mrb[0].mxu0
        %v954 = vadd.f32 %v349, %v953
        %v955 = vpop.f32.mrb[0].mxu0
        %v956 = vpop.f32.mrb[0].mxu0
        %v957 = vadd.f32 %v349, %v956
        %v958 = vpop.f32.mrb[0].mxu0
        %959 = vmatprep.mubr.bf16.mxu0 %v584
        %960 = vmatmul.mubr.bf16.gmra.mrb[0].mxu0 %v583
        %v961 = vpop.f32.mrb[0].mxu0
        %v962 = vadd.f32 %v349, %v961
        %v963 = vpop.f32.mrb[0].mxu0
        %v964 = vpop.f32.mrb[0].mxu0
        %v965 = vadd.f32 %v349, %v964
        %v966 = vpop.f32.mrb[0].mxu0
        %967 = vmatprep.mubr.bf16.mxu0 %v586
        %968 = vmatmul.mubr.bf16.gmra.mrb[0].mxu0 %v585
        %v969 = vpop.f32.mrb[0].mxu0
        %v970 = vadd.f32 %v349, %v969
        %v971 = vpop.f32.mrb[0].mxu0
        %v972 = vpop.f32.mrb[0].mxu0
        %v973 = vadd.f32 %v349, %v972
        %v974 = vpop.f32.mrb[0].mxu0
        %975 = vmatprep.mubr.bf16.mxu0 %v588
        %976 = vmatmul.mubr.bf16.gmra.mrb[0].mxu0 %v587
        %v977 = vpop.f32.mrb[0].mxu0
        %v978 = vadd.f32 %v349, %v977
        %v979 = vpop.f32.mrb[0].mxu0
        %v980 = vpop.f32.mrb[0].mxu0
        %v981 = vadd.f32 %v349, %v980
        %v982 = vpop.f32.mrb[0].mxu0
        %983 = vmatprep.mubr.bf16.mxu0 %v590
        %984 = vmatmul.mubr.bf16.gmra.mrb[0].mxu0 %v589
        %v985 = vpop.f32.mrb[0].mxu0
        %v986 = vadd.f32 %v349, %v985
        %v987 = vpop.f32.mrb[0].mxu0
        %v988 = vpop.f32.mrb[0].mxu0
        %v989 = vadd.f32 %v349, %v988
        %v990 = vpop.f32.mrb[0].mxu0
        %991 = vmatprep.mubr.bf16.mxu0 %v592
        %992 = vmatmul.mubr.bf16.gmra.mrb[0].mxu0 %v591
        %v993 = vpop.f32.mrb[0].mxu0
        %v994 = vadd.f32 %v349, %v993
        %v995 = vpop.f32.mrb[0].mxu0
        %v996 = vpop.f32.mrb[0].mxu0
        %v997 = vadd.f32 %v349, %v996
        %v998 = vpop.f32.mrb[0].mxu0
        %999 = vmatprep.mubr.bf16.mxu0 %v594
        %1000 = vmatmul.mubr.bf16.gmra.mrb[0].mxu0 %v593
        %v1001 = vpop.f32.mrb[0].mxu0
        %v1002 = vadd.f32 %v349, %v1001
        %v1003 = vpop.f32.mrb[0].mxu0
        %v1004 = vpop.f32.mrb[0].mxu0
        %v1005 = vadd.f32 %v349, %v1004
        %v1006 = vpop.f32.mrb[0].mxu0
        %1007 = vmatprep.mubr.bf16.mxu0 %v596
        %1008 = vmatmul.mubr.bf16.gmra.mrb[0].mxu0 %v595
        %v1009 = vpop.f32.mrb[0].mxu0
        %v1010 = vadd.f32 %v349, %v1009
        %v1011 = vpop.f32.mrb[0].mxu0
        %v1012 = vpop.f32.mrb[0].mxu0
        %v1013 = vadd.f32 %v349, %v1012
        %v1014 = vpop.f32.mrb[0].mxu0
        %1015 = vmatprep.mubr.bf16.mxu0 %v598
        %1016 = vmatmul.mubr.bf16.gmra.mrb[0].mxu0 %v597
        %v1017 = vpop.f32.mrb[0].mxu0
        %v1018 = vadd.f32 %v349, %v1017
        %v1019 = vpop.f32.mrb[0].mxu0
        %v1020 = vpop.f32.mrb[0].mxu0
        %v1021 = vadd.f32 %v349, %v1020
        %v1022 = vpop.f32.mrb[0].mxu0
        %1023 = vmatprep.mubr.bf16.mxu0 %v600
        %1024 = vmatmul.mubr.bf16.gmra.mrb[0].mxu0 %v599
        %v1025 = vpop.f32.mrb[0].mxu0
        %v1026 = vadd.f32 %v349, %v1025
        %v1027 = vpop.f32.mrb[0].mxu0
        %v1028 = vpop.f32.mrb[0].mxu0
        %v1029 = vadd.f32 %v349, %v1028
        %v1030 = vpop.f32.mrb[0].mxu0
        %1031 = vmatprep.mubr.bf16.mxu0 %v602
        %1032 = vmatmul.mubr.bf16.gmra.mrb[0].mxu0 %v601
        %v1033 = vpop.f32.mrb[0].mxu0
        %v1034 = vadd.f32 %v349, %v1033
        %v1035 = vpop.f32.mrb[0].mxu0
        %v1036 = vpop.f32.mrb[0].mxu0
        %v1037 = vadd.f32 %v349, %v1036
        %v1038 = vpop.f32.mrb[0].mxu0
        %1039 = vmatprep.mubr.bf16.mxu0 %v604
        %1040 = vmatmul.mubr.bf16.gmra.mrb[0].mxu0 %v603
        %v1041 = vpop.f32.mrb[0].mxu0
        %v1042 = vadd.f32 %v349, %v1041
        %v1043 = vpop.f32.mrb[0].mxu0
        %v1044 = vpop.f32.mrb[0].mxu0
        %v1045 = vadd.f32 %v349, %v1044
        %v1046 = vpop.f32.mrb[0].mxu0
        %1047 = vmatprep.mubr.bf16.mxu0 %v606
        %1048 = vmatmul.mubr.bf16.gmra.mrb[0].mxu0 %v605
        %v1049 = vpop.f32.mrb[0].mxu0
        %v1050 = vadd.f32 %v349, %v1049
        %v1051 = vpop.f32.mrb[0].mxu0
        %v1052 = vpop.f32.mrb[0].mxu0
        %v1053 = vadd.f32 %v349, %v1052
        %v1054 = vpop.f32.mrb[0].mxu0
        %1055 = vdwg.mxu0
        %v1056 = vmax.f32 %v802, 0.0
        %v1057 = vmax.f32 %v805, 0.0
        %v1058 = vmax.f32 %v810, 0.0
        %v1059 = vmax.f32 %v813, 0.0
        %v1060 = vmax.f32 %v818, 0.0
        %v1061 = vmax.f32 %v821, 0.0
        %v1062 = vmax.f32 %v826, 0.0
        %v1063 = vmax.f32 %v829, 0.0
        %v1064 = vmax.f32 %v834, 0.0
        %v1065 = vmax.f32 %v837, 0.0
        %v1066 = vmax.f32 %v842, 0.0
        %v1067 = vmax.f32 %v845, 0.0
        %v1068 = vmax.f32 %v850, 0.0
        %v1069 = vmax.f32 %v853, 0.0
        %v1070 = vmax.f32 %v858, 0.0
        %v1071 = vmax.f32 %v861, 0.0
        %v1072 = vmax.f32 %v866, 0.0
        %v1073 = vmax.f32 %v869, 0.0
        %v1074 = vmax.f32 %v874, 0.0
        %v1075 = vmax.f32 %v877, 0.0
        %v1076 = vmax.f32 %v882, 0.0
        %v1077 = vmax.f32 %v885, 0.0
        %v1078 = vmax.f32 %v890, 0.0
        %v1079 = vmax.f32 %v893, 0.0
        %v1080 = vmax.f32 %v898, 0.0
        %v1081 = vmax.f32 %v901, 0.0
        %v1082 = vmax.f32 %v906, 0.0
        %v1083 = vmax.f32 %v909, 0.0
        %v1084 = vmax.f32 %v914, 0.0
        %v1085 = vmax.f32 %v917, 0.0
        %v1086 = vmax.f32 %v922, 0.0
        %v1087 = vmax.f32 %v925, 0.0
        %v1088 = vmax.f32 %v930, 0.0
        %v1089 = vmax.f32 %v933, 0.0
        %v1090 = vmax.f32 %v938, 0.0
        %v1091 = vmax.f32 %v941, 0.0
        %v1092 = vmax.f32 %v946, 0.0
        %v1093 = vmax.f32 %v949, 0.0
        %v1094 = vmax.f32 %v954, 0.0
        %v1095 = vmax.f32 %v957, 0.0
        %v1096 = vmax.f32 %v962, 0.0
        %v1097 = vmax.f32 %v965, 0.0
        %v1098 = vmax.f32 %v970, 0.0
        %v1099 = vmax.f32 %v973, 0.0
        %v1100 = vmax.f32 %v978, 0.0
        %v1101 = vmax.f32 %v981, 0.0
        %v1102 = vmax.f32 %v986, 0.0
        %v1103 = vmax.f32 %v989, 0.0
        %v1104 = vmax.f32 %v994, 0.0
        %v1105 = vmax.f32 %v997, 0.0
        %v1106 = vmax.f32 %v1002, 0.0
        %v1107 = vmax.f32 %v1005, 0.0
        %v1108 = vmax.f32 %v1010, 0.0
        %v1109 = vmax.f32 %v1013, 0.0
        %v1110 = vmax.f32 %v1018, 0.0
        %v1111 = vmax.f32 %v1021, 0.0
        %v1112 = vmax.f32 %v1026, 0.0
        %v1113 = vmax.f32 %v1029, 0.0
        %v1114 = vmax.f32 %v1034, 0.0
        %v1115 = vmax.f32 %v1037, 0.0
        %v1116 = vmax.f32 %v1042, 0.0
        %v1117 = vmax.f32 %v1045, 0.0
        %v1118 = vmax.f32 %v1050, 0.0
        %v1119 = vmax.f32 %v1053, 0.0
        %v1120 = vpack.c.bf16 %v1057, %v1056
        %v1121 = vpack.c.bf16 %v1059, %v1058
        %v1122 = vpack.c.bf16 %v1061, %v1060
        %v1123 = vpack.c.bf16 %v1063, %v1062
        %v1124 = vpack.c.bf16 %v1065, %v1064
        %v1125 = vpack.c.bf16 %v1067, %v1066
        %v1126 = vpack.c.bf16 %v1069, %v1068
        %v1127 = vpack.c.bf16 %v1071, %v1070
        %v1128 = vpack.c.bf16 %v1073, %v1072
        %v1129 = vpack.c.bf16 %v1075, %v1074
        %v1130 = vpack.c.bf16 %v1077, %v1076
        %v1131 = vpack.c.bf16 %v1079, %v1078
        %v1132 = vpack.c.bf16 %v1081, %v1080
        %v1133 = vpack.c.bf16 %v1083, %v1082
        %v1134 = vpack.c.bf16 %v1085, %v1084
        %v1135 = vpack.c.bf16 %v1087, %v1086
        %v1136 = vpack.c.bf16 %v1089, %v1088
        %v1137 = vpack.c.bf16 %v1091, %v1090
        %v1138 = vpack.c.bf16 %v1093, %v1092
        %v1139 = vpack.c.bf16 %v1095, %v1094
        %v1140 = vpack.c.bf16 %v1097, %v1096
        %v1141 = vpack.c.bf16 %v1099, %v1098
        %v1142 = vpack.c.bf16 %v1101, %v1100
        %v1143 = vpack.c.bf16 %v1103, %v1102
        %v1144 = vpack.c.bf16 %v1105, %v1104
        %v1145 = vpack.c.bf16 %v1107, %v1106
        %v1146 = vpack.c.bf16 %v1109, %v1108
        %v1147 = vpack.c.bf16 %v1111, %v1110
        %v1148 = vpack.c.bf16 %v1113, %v1112
        %v1149 = vpack.c.bf16 %v1115, %v1114
        %v1150 = vpack.c.bf16 %v1117, %v1116
        %v1151 = vpack.c.bf16 %v1119, %v1118
        %v1184 = vunpack.c.l.b16 %v1120
        %v1185 = vunpack.c.h.b16 %v1120
        %v1186 = vunpack.c.l.b16 %v1121
        %v1187 = vunpack.c.h.b16 %v1121
        %v1188 = vunpack.c.l.b16 %v1122
        %v1189 = vunpack.c.h.b16 %v1122
        %v1190 = vunpack.c.l.b16 %v1123
        %v1191 = vunpack.c.h.b16 %v1123
        %v1192 = vunpack.c.l.b16 %v1124
        %v1193 = vunpack.c.h.b16 %v1124
        %v1194 = vunpack.c.l.b16 %v1125
        %v1195 = vunpack.c.h.b16 %v1125
        %v1196 = vunpack.c.l.b16 %v1126
        %v1197 = vunpack.c.h.b16 %v1126
        %v1198 = vunpack.c.l.b16 %v1127
        %v1199 = vunpack.c.h.b16 %v1127
        %v1200 = vunpack.c.l.b16 %v1128
        %v1201 = vunpack.c.h.b16 %v1128
        %v1202 = vunpack.c.l.b16 %v1129
        %v1203 = vunpack.c.h.b16 %v1129
        %v1204 = vunpack.c.l.b16 %v1130
        %v1205 = vunpack.c.h.b16 %v1130
        %v1206 = vunpack.c.l.b16 %v1131
        %v1207 = vunpack.c.h.b16 %v1131
        %v1208 = vunpack.c.l.b16 %v1132
        %v1209 = vunpack.c.h.b16 %v1132
        %v1210 = vunpack.c.l.b16 %v1133
        %v1211 = vunpack.c.h.b16 %v1133
        %v1212 = vunpack.c.l.b16 %v1134
        %v1213 = vunpack.c.h.b16 %v1134
        %v1214 = vunpack.c.l.b16 %v1135
        %v1215 = vunpack.c.h.b16 %v1135
        %v1216 = vunpack.c.l.b16 %v1136
        %v1217 = vunpack.c.h.b16 %v1136
        %v1218 = vunpack.c.l.b16 %v1137
        %v1219 = vunpack.c.h.b16 %v1137
        %v1220 = vunpack.c.l.b16 %v1138
        %v1221 = vunpack.c.h.b16 %v1138
        %v1222 = vunpack.c.l.b16 %v1139
        %v1223 = vunpack.c.h.b16 %v1139
        %v1224 = vunpack.c.l.b16 %v1140
        %v1225 = vunpack.c.h.b16 %v1140
        %v1226 = vunpack.c.l.b16 %v1141
        %v1227 = vunpack.c.h.b16 %v1141
        %v1228 = vunpack.c.l.b16 %v1142
        %v1229 = vunpack.c.h.b16 %v1142
        %v1230 = vunpack.c.l.b16 %v1143
        %v1231 = vunpack.c.h.b16 %v1143
        %v1232 = vunpack.c.l.b16 %v1144
        %v1233 = vunpack.c.h.b16 %v1144
        %v1234 = vunpack.c.l.b16 %v1145
        %v1235 = vunpack.c.h.b16 %v1145
        %v1236 = vunpack.c.l.b16 %v1146
        %v1237 = vunpack.c.h.b16 %v1146
        %v1238 = vunpack.c.l.b16 %v1147
        %v1239 = vunpack.c.h.b16 %v1147
        %v1240 = vunpack.c.l.b16 %v1148
        %v1241 = vunpack.c.h.b16 %v1148
        %v1242 = vunpack.c.l.b16 %v1149
        %v1243 = vunpack.c.h.b16 %v1149
        %v1244 = vunpack.c.l.b16 %v1150
        %v1245 = vunpack.c.h.b16 %v1150
        %v1246 = vunpack.c.l.b16 %v1151
        %v1247 = vunpack.c.h.b16 %v1151
        %v1248 = vpack.c.b16 %v1184, %v1184
        %v1249 = vpack.c.b16 %v1185, %v1185
        %v1250 = vpack.c.b16 %v1186, %v1186
        %v1251 = vpack.c.b16 %v1187, %v1187
        %v1252 = vpack.c.b16 %v1188, %v1188
        %v1253 = vpack.c.b16 %v1189, %v1189
        %v1254 = vpack.c.b16 %v1190, %v1190
        %v1255 = vpack.c.b16 %v1191, %v1191
        %v1256 = vpack.c.b16 %v1192, %v1192
        %v1257 = vpack.c.b16 %v1193, %v1193
        %v1258 = vpack.c.b16 %v1194, %v1194
        %v1259 = vpack.c.b16 %v1195, %v1195
        %v1260 = vpack.c.b16 %v1196, %v1196
        %v1261 = vpack.c.b16 %v1197, %v1197
        %v1262 = vpack.c.b16 %v1198, %v1198
        %v1263 = vpack.c.b16 %v1199, %v1199
        %v1264 = vpack.c.b16 %v1200, %v1200
        %v1265 = vpack.c.b16 %v1201, %v1201
        %v1266 = vpack.c.b16 %v1202, %v1202
        %v1267 = vpack.c.b16 %v1203, %v1203
        %v1268 = vpack.c.b16 %v1204, %v1204
        %v1269 = vpack.c.b16 %v1205, %v1205
        %v1270 = vpack.c.b16 %v1206, %v1206
        %v1271 = vpack.c.b16 %v1207, %v1207
        %v1272 = vpack.c.b16 %v1208, %v1208
        %v1273 = vpack.c.b16 %v1209, %v1209
        %v1274 = vpack.c.b16 %v1210, %v1210
        %v1275 = vpack.c.b16 %v1211, %v1211
        %v1276 = vpack.c.b16 %v1212, %v1212
        %v1277 = vpack.c.b16 %v1213, %v1213
        %v1278 = vpack.c.b16 %v1214, %v1214
        %v1279 = vpack.c.b16 %v1215, %v1215
        %v1280 = vpack.c.b16 %v1216, %v1216
        %v1281 = vpack.c.b16 %v1217, %v1217
        %v1282 = vpack.c.b16 %v1218, %v1218
        %v1283 = vpack.c.b16 %v1219, %v1219
        %v1284 = vpack.c.b16 %v1220, %v1220
        %v1285 = vpack.c.b16 %v1221, %v1221
        %v1286 = vpack.c.b16 %v1222, %v1222
        %v1287 = vpack.c.b16 %v1223, %v1223
        %v1288 = vpack.c.b16 %v1224, %v1224
        %v1289 = vpack.c.b16 %v1225, %v1225
        %v1290 = vpack.c.b16 %v1226, %v1226
        %v1291 = vpack.c.b16 %v1227, %v1227
        %v1292 = vpack.c.b16 %v1228, %v1228
        %v1293 = vpack.c.b16 %v1229, %v1229
        %v1294 = vpack.c.b16 %v1230, %v1230
        %v1295 = vpack.c.b16 %v1231, %v1231
        %v1296 = vpack.c.b16 %v1232, %v1232
        %v1297 = vpack.c.b16 %v1233, %v1233
        %v1298 = vpack.c.b16 %v1234, %v1234
        %v1299 = vpack.c.b16 %v1235, %v1235
        %v1300 = vpack.c.b16 %v1236, %v1236
        %v1301 = vpack.c.b16 %v1237, %v1237
        %v1302 = vpack.c.b16 %v1238, %v1238
        %v1303 = vpack.c.b16 %v1239, %v1239
        %v1304 = vpack.c.b16 %v1240, %v1240
        %v1305 = vpack.c.b16 %v1241, %v1241
        %v1306 = vpack.c.b16 %v1242, %v1242
        %v1307 = vpack.c.b16 %v1243, %v1243
        %v1308 = vpack.c.b16 %v1244, %v1244
        %v1309 = vpack.c.b16 %v1245, %v1245
        %v1310 = vpack.c.b16 %v1246, %v1246
        %v1311 = vpack.c.b16 %v1247, %v1247
        %1376 = vst [vmem:[%s244] sm:$0xf] %v1248
        %1377 = vst [vmem:[%s244 + $0x4] sm:$0xf] %v1249
        %1378 = vst [vmem:[%s244 + $0x8] sm:$0xf] %v1250
        %1379 = vst [vmem:[%s244 + $0xc] sm:$0xf] %v1251
        %1380 = vst [vmem:[%s244 + $0x10] sm:$0xf] %v1252
        %1381 = vst [vmem:[%s244 + $0x14] sm:$0xf] %v1253
        %1382 = vst [vmem:[%s244 + $0x18] sm:$0xf] %v1254
        %1383 = vst [vmem:[%s244 + $0x1c] sm:$0xf] %v1255
        %1384 = vst [vmem:[%s244 + $0x20] sm:$0xf] %v1256
        %1385 = vst [vmem:[%s244 + $0x24] sm:$0xf] %v1257
        %1386 = vst [vmem:[%s244 + $0x28] sm:$0xf] %v1258
        %1387 = vst [vmem:[%s244 + $0x2c] sm:$0xf] %v1259
        %1388 = vst [vmem:[%s244 + $0x30] sm:$0xf] %v1260
        %1389 = vst [vmem:[%s244 + $0x34] sm:$0xf] %v1261
        %1390 = vst [vmem:[%s244 + $0x38] sm:$0xf] %v1262
        %1391 = vst [vmem:[%s244 + $0x3c] sm:$0xf] %v1263
        %1392 = vst [vmem:[%s244 + $0x40] sm:$0xf] %v1264
        %1393 = vst [vmem:[%s244 + $0x44] sm:$0xf] %v1265
        %1394 = vst [vmem:[%s244 + $0x48] sm:$0xf] %v1266
        %1395 = vst [vmem:[%s244 + $0x4c] sm:$0xf] %v1267
        %1396 = vst [vmem:[%s244 + $0x50] sm:$0xf] %v1268
        %1397 = vst [vmem:[%s244 + $0x54] sm:$0xf] %v1269
        %1398 = vst [vmem:[%s244 + $0x58] sm:$0xf] %v1270
        %1399 = vst [vmem:[%s244 + $0x5c] sm:$0xf] %v1271
        %1400 = vst [vmem:[%s244 + $0x60] sm:$0xf] %v1272
        %1401 = vst [vmem:[%s244 + $0x64] sm:$0xf] %v1273
        %1402 = vst [vmem:[%s244 + $0x68] sm:$0xf] %v1274
        %1403 = vst [vmem:[%s244 + $0x6c] sm:$0xf] %v1275
        %1404 = vst [vmem:[%s244 + $0x70] sm:$0xf] %v1276
        %1405 = vst [vmem:[%s244 + $0x74] sm:$0xf] %v1277
        %1406 = vst [vmem:[%s244 + $0x78] sm:$0xf] %v1278
        %1407 = vst [vmem:[%s244 + $0x7c] sm:$0xf] %v1279
        %1408 = vst [vmem:[%s244 + $0x80] sm:$0xf] %v1280
        %1409 = vst [vmem:[%s244 + $0x84] sm:$0xf] %v1281
        %1410 = vst [vmem:[%s244 + $0x88] sm:$0xf] %v1282
        %1411 = vst [vmem:[%s244 + $0x8c] sm:$0xf] %v1283
        %1412 = vst [vmem:[%s244 + $0x90] sm:$0xf] %v1284
        %1413 = vst [vmem:[%s244 + $0x94] sm:$0xf] %v1285
        %1414 = vst [vmem:[%s244 + $0x98] sm:$0xf] %v1286
        %1415 = vst [vmem:[%s244 + $0x9c] sm:$0xf] %v1287
        %1416 = vst [vmem:[%s244 + $0xa0] sm:$0xf] %v1288
        %1417 = vst [vmem:[%s244 + $0xa4] sm:$0xf] %v1289
        %1418 = vst [vmem:[%s244 + $0xa8] sm:$0xf] %v1290
        %1419 = vst [vmem:[%s244 + $0xac] sm:$0xf] %v1291
        %1420 = vst [vmem:[%s244 + $0xb0] sm:$0xf] %v1292
        %1421 = vst [vmem:[%s244 + $0xb4] sm:$0xf] %v1293
        %1422 = vst [vmem:[%s244 + $0xb8] sm:$0xf] %v1294
        %1423 = vst [vmem:[%s244 + $0xbc] sm:$0xf] %v1295
        %1424 = vst [vmem:[%s244 + $0xc0] sm:$0xf] %v1296
        %1425 = vst [vmem:[%s244 + $0xc4] sm:$0xf] %v1297
        %1426 = vst [vmem:[%s244 + $0xc8] sm:$0xf] %v1298
        %1427 = vst [vmem:[%s244 + $0xcc] sm:$0xf] %v1299
        %1428 = vst [vmem:[%s244 + $0xd0] sm:$0xf] %v1300
        %1429 = vst [vmem:[%s244 + $0xd4] sm:$0xf] %v1301
        %1430 = vst [vmem:[%s244 + $0xd8] sm:$0xf] %v1302
        %1431 = vst [vmem:[%s244 + $0xdc] sm:$0xf] %v1303
        %1432 = vst [vmem:[%s244 + $0xe0] sm:$0xf] %v1304
        %1433 = vst [vmem:[%s244 + $0xe4] sm:$0xf] %v1305
        %1434 = vst [vmem:[%s244 + $0xe8] sm:$0xf] %v1306
        %1435 = vst [vmem:[%s244 + $0xec] sm:$0xf] %v1307
        %1436 = vst [vmem:[%s244 + $0xf0] sm:$0xf] %v1308
        %1437 = vst [vmem:[%s244 + $0xf4] sm:$0xf] %v1309
        %1438 = vst [vmem:[%s244 + $0xf8] sm:$0xf] %v1310
        %1439 = vst [vmem:[%s244 + $0xfc] sm:$0xf] %v1311
        %s1440 = sand.u32 %s121, 1
        %s1441 = scalar_lea.sflag [#allocation4], %s1440
        %s1442 = sand.u32 %s121, 1
        %s1443 = smul.addr %s1442, 256
        %s1444 = scalar_lea.vmem [#allocation8], %s1443
        // Predicated region
        $region45: #{tpu_custom_call.1} parent=31 // pred_check
          %p1445 = pneg %p131
        $region46: #{tpu_custom_call.1} parent=31 // pred_check_branch
          %1447 = sbr.rel (%p1445) target = $region48
        $region47: #{tpu_custom_call.1} parent=31 // pred_region
          %s1448 = smul.u32 64, %s25
          %s1450 = ssub.s32 4096, 4096
          %1451 = vsyncadd %s1441, %s1450
          %s1452 = sadd.s32 %s26, %s1448
          %s1453 = smul.addr %s1452, 64
          %s1454 = scalar_lea.hbm %s3, %s1453
          %s1455 = sshll.u32 %s1444, 4
          %s1456 = int_to_ptr.vmem [resolvable:$true] %s1455
          %1461 = dma.vmem_to_hbm [thread:$0]  %s1456, 4096, %s1454, %s1441, 64, 64, 4
        $region48: #{tpu_custom_call.1} parent=31 // pred_fallthru
          _
      $region32: #{tpu_custom_call.1} parent=5 // pred_fallthru
        _
      %p1462 = scmp.le.s32.totalorder 2, %s16
      // Predicated region
      $region49: #{tpu_custom_call.1} parent=5 // pred_check
        %p1463 = pneg %p1462
      $region50: #{tpu_custom_call.1} parent=5 // pred_check_branch
        %1465 = sbr.rel (%p1463) target = $region52
      $region51: #{tpu_custom_call.1} parent=5 // pred_region
        %s1466 = ssub.s32 %s16, 2
        // Predicated region
        $region53: #{tpu_custom_call.1} parent=51 // pred_check
          %p1467 = pneg %p137
        $region54: #{tpu_custom_call.1} parent=51 // pred_check_branch
          %1469 = sbr.rel (%p1467) target = $region56
        $region55: #{tpu_custom_call.1} parent=51 // pred_region
          %s1470 = sand.u32 %s122, 1
          %s1471 = scalar_lea.sflag [#allocation4], %s1470
          %s1472 = sand.u32 %s122, 1
          %s1473 = smul.addr %s1472, 256
          %s1474 = scalar_lea.vmem [#allocation8], %s1473
          %1475 = dma.done %s1471, 4096
        $region56: #{tpu_custom_call.1} parent=51 // pred_fallthru
          _
      $region52: #{tpu_custom_call.1} parent=5 // pred_fallthru
        _
    $region6: #{tpu_custom_call.1} parent=1 // loop_footer
      %s20 = sadd.s32 1, %s16
    $region7: #{tpu_custom_call.1} parent=1 // loop_footer_branch
      %15 = sbr.rel target = $region3
    $region8: #{tpu_custom_call.1} parent=1 // loop_exit
      _
    %1476 = vsyncpa [#allocation3], 1
    %s1477 = scalar_lea.sflag [#allocation3], 1
    %1478 = vsyncpa %s1477, 1
    %1479 = vsyncpa [#allocation6], 1
    %1480 = vsyncpa [#allocation4], 1
    %s1481 = scalar_lea.sflag [#allocation4], 1
    %1482 = vsyncpa %s1481, 1

</llo_original>
